<compile_context>
chip_gen: v6e
topology: v6e:2x2x1
jax: 0.10.0
libtpu: 0.0.40
codegen_flags: <defaults>
</compile_context>

<pallas_src>
import jax
import jax.numpy as jnp
from jax import lax
from jax.experimental import pallas as pl
from jax.experimental.pallas import tpu as pltpu


# --------------------------------------------------------------------------
# Kernel
# --------------------------------------------------------------------------
def _mbconv_kernel(x_ref, xt_ref, xb_ref, we_ref, b0_ref, wfc_ref, b1_ref,
                   wr_ref, b2_ref, o_ref, eext_ref):
    # x_ref   : (1, C, TH*W)     flattened rows of this tile (channels-first)
    # xt_ref  : (1, 1, C, W)     image row just above the tile (zeros at top edge)
    # xb_ref  : (1, 1, C, W)     image row just below the tile (zeros at bottom edge)
    # we_ref  : (IC, C)          expand 1x1 weight (weight-on-the-left)
    # b0_ref  : (IC, 1)          expand bias (also the pad border value)
    # wfc_ref : (IC, 9*IC)       3x3 weight, attn-scaled, identity folded into
    #                            the centre tap, taps ordered (ky, kx) row-major
    # b1_ref  : (IC, 1)          attn * fea bias
    # wr_ref  : (C, IC)          reduce 1x1 weight
    # b2_ref  : (C, 1)           reduce bias
    # eext_ref: VMEM scratch (IC, TH*W + 4*W) holding the expand output with
    #           one halo row above/below plus one junk row on each end (the
    #           junk rows are only ever read at masked lanes).
    thw = x_ref.shape[2]
    W = xt_ref.shape[3]
    IC = we_ref.shape[0]

    x = x_ref[0]                              # (C, thw)
    we = we_ref[...]                          # (IC, C)
    b0 = b0_ref[...]                          # (IC, 1)

    # --- expand_conv (1x1) on the tile and its one-row halos.  A zero input
    #     row gives We@0 + b0 = b0, which is exactly what pad_tensor() writes
    #     on the border, so image-edge halos are correct "for free".
    e_main = jnp.dot(we, x, preferred_element_type=jnp.float32) + b0
    e_top = jnp.dot(we, xt_ref[0, 0], preferred_element_type=jnp.float32) + b0
    e_bot = jnp.dot(we, xb_ref[0, 0], preferred_element_type=jnp.float32) + b0

    border = jnp.broadcast_to(b0, (IC, W))
    eext_ref[:, 0:W] = border                           # junk (masked lanes only)
    eext_ref[:, W:2 * W] = e_top                        # row above the tile
    eext_ref[:, 2 * W:2 * W + thw] = e_main             # the tile itself
    eext_ref[:, 2 * W + thw:3 * W + thw] = e_bot        # row below the tile
    eext_ref[:, 3 * W + thw:4 * W + thw] = border       # junk (masked lanes only)

    # --- fea_conv (3x3, pad-with-b0) as ONE MXU matmul over 9 shifted taps.
    #     Output lane j has (row, col) = divmod(j, W); its (dy, dx) tap lives
    #     at lane j + (2+dy)*W + dx of eext.  Column wrap-around (dx = +-1 at
    #     the image's left/right edge) is replaced by the pad value b0.
    w_idx = lax.broadcasted_iota(jnp.int32, (1, thw), 1) % W
    not_left_edge = w_idx > 0                            # hoisted: reused 3x each
    not_right_edge = w_idx < W - 1
    taps = []
    for dy in (-1, 0, 1):
        for dx in (-1, 0, 1):
            s = (2 + dy) * W + dx
            t = eext_ref[:, s:s + thw]                   # (IC, thw)
            if dx == -1:
                t = jnp.where(not_left_edge, t, b0)
            elif dx == 1:
                t = jnp.where(not_right_edge, t, b0)
            taps.append(t)
    taps_cat = jnp.concatenate(taps, axis=0)             # (9*IC, thw)

    # attn and the "+ out_identity" residual are already folded into wfc.
    out3 = jnp.dot(wfc_ref[...], taps_cat,
                   preferred_element_type=jnp.float32) + b1_ref[...]

    # --- reduce_conv (1x1) + input residual (single fused add chain).
    y = jnp.dot(wr_ref[...], out3,
                preferred_element_type=jnp.float32) + b2_ref[...] + x
    o_ref[0] = y.astype(o_ref.dtype)


# --------------------------------------------------------------------------
# Wrapper-side helpers
# --------------------------------------------------------------------------
def _pick_tile_rows(H, W, C, IC, vmem_budget_bytes):
    """Largest row-tile whose f32 working set fits the VMEM budget.

    (tile_rows * W) must be a multiple of 128 lanes unless the whole image is
    a single tile.  Default budget is sized for v7x (64 MiB VMEM/core, ~half
    of v5e/v6e), with headroom for double buffering.
    """
    bytes_per_row = 4 * W * (4 * C + 14 * IC + 8)   # x/y dbl-buf + taps + scratch
    max_rows = max(1, vmem_budget_bytes // bytes_per_row)
    cands = [th for th in range(1, H + 1)
             if H % th == 0 and (th * W) % 128 == 0]
    if not cands:
        return H                                    # single whole-image tile
    fitting = [th for th in cands if th <= max_rows]
    return max(fitting) if fitting else min(cands)


def _build_row_halos(x, tile_rows):
    """Tiny (B, n_tiles, C, W) arrays with the image row above/below each tile
    (zeros at the image border -> expand conv turns them into the b0 pad)."""
    B, C, H, W = x.shape
    n = H // tile_rows
    zero = jnp.zeros((B, 1, C, W), x.dtype)
    if n == 1:
        return zero, zero
    top = jnp.transpose(x[:, :, tile_rows - 1:H - 1:tile_rows, :], (0, 2, 1, 3))
    bot = jnp.transpose(x[:, :, tile_rows:H:tile_rows, :], (0, 2, 1, 3))
    return (jnp.concatenate([zero, top], axis=1),
            jnp.concatenate([bot, zero], axis=1))


def prepare_kernel_params(raw):
    """Fold ASR attention + identity residual into the 3x3 weight (pure algebra,
    same trick MBConv.switch_to_deploy uses) and lay weights out for the kernel."""
    we, b0, wf, b1, wr, b2, attn = raw
    IC, C = we.shape
    wf_a = wf * attn[:, None, None, None]            # scale output channels
    b1_a = b1 * attn
    # (O, I, ky, kx) -> (O, ky, kx, I) -> (O, 9*I); column block k = ky*3+kx.
    wf_cat = jnp.transpose(wf_a, (0, 2, 3, 1)).reshape(IC, 9 * IC)
    # "+ out_identity": add identity on the centre tap (ky = kx = 1 -> block 4).
    wf_cat = wf_cat.at[:, 4 * IC:5 * IC].add(jnp.eye(IC, dtype=wf_cat.dtype))
    return (we, b0.reshape(IC, 1), wf_cat, b1_a.reshape(IC, 1),
            wr, b2.reshape(C, 1))


def mbconv_pallas(x_nchw, raw_params, tile_rows=None,
                  vmem_budget_bytes=20 * 1024 * 1024):
    """x_nchw: (B, C, H, W) float32.  Returns (B, C, H, W)."""
    we, b0c, wf_cat, b1c, wr, b2c = prepare_kernel_params(raw_params)
    B, C, H, W = x_nchw.shape
    IC = we.shape[0]

    if tile_rows is None:
        tile_rows = _pick_tile_rows(H, W, C, IC, vmem_budget_bytes)
    assert H % tile_rows == 0, (H, tile_rows)
    n_tiles = H // tile_rows
    thw = tile_rows * W
    assert thw % 128 == 0 or n_tiles == 1, (tile_rows, W)

    x_flat = x_nchw.reshape(B, C, H * W)        # free reshape (NCHW contiguous)
    x_top, x_bot = _build_row_halos(x_nchw, tile_rows)

    def full_spec(arr):
        nd = arr.ndim
        return pl.BlockSpec(arr.shape, lambda b, i: (0,) * nd)

    out = pl.pallas_call(
        _mbconv_kernel,
        out_shape=jax.ShapeDtypeStruct((B, C, H * W), jnp.float32),
        grid=(B, n_tiles),
        in_specs=[
            pl.BlockSpec((1, C, thw), lambda b, i: (b, 0, i)),      # x tile
            pl.BlockSpec((1, 1, C, W), lambda b, i: (b, i, 0, 0)),  # top halo row
            pl.BlockSpec((1, 1, C, W), lambda b, i: (b, i, 0, 0)),  # bottom halo row
            full_spec(we), full_spec(b0c), full_spec(wf_cat),
            full_spec(b1c), full_spec(wr), full_spec(b2c),
        ],
        out_specs=pl.BlockSpec((1, C, thw), lambda b, i: (b, 0, i)),
        scratch_shapes=[pltpu.VMEM((IC, thw + 4 * W), jnp.float32)],
        input_output_aliases={0: 0},            # y tile overwrites its x tile
        compiler_params=pltpu.CompilerParams(
            dimension_semantics=("parallel", "parallel"),
            vmem_limit_bytes=48 * 1024 * 1024),
    )(x_flat, x_top, x_bot, we, b0c, wf_cat, b1c, wr, b2c)

    return out.reshape(B, C, H, W)


# --------------------------------------------------------------------------
# Pure-JAX reference (faithful to the PyTorch MBConv.forward) + params
# --------------------------------------------------------------------------
def mbconv_reference(x, raw):
    we, b0, wf, b1, wr, b2, attn = raw
    B, C, H, W = x.shape
    IC = we.shape[0]

    out = jnp.einsum('oc,bchw->bohw', we, x) + b0.reshape(1, IC, 1, 1)
    out_identity = out

    pad = jnp.pad(out, ((0, 0), (0, 0), (1, 1), (1, 1)))        # pad_tensor
    pat = b0.reshape(1, IC, 1)
    pad = pad.at[:, :, 0, :].set(pat)
    pad = pad.at[:, :, -1, :].set(pat)
    pad = pad.at[:, :, :, 0].set(pat)
    pad = pad.at[:, :, :, -1].set(pat)

    fea = jnp.zeros((B, IC, H, W), jnp.float32) + b1.reshape(1, IC, 1, 1)
    for ky in range(3):
        for kx in range(3):
            fea = fea + jnp.einsum('oi,bihw->bohw', wf[:, :, ky, kx],
                                   pad[:, :, ky:ky + H, kx:kx + W])

    out = attn.reshape(1, IC, 1, 1) * fea + out_identity
    y = jnp.einsum('oi,bihw->bohw', wr, out) + b2.reshape(1, -1, 1, 1) + x
    return y


def make_params(key, n_feat, ratio=2):
    """Deterministic synthetic parameters with the module's __init__ shapes."""
    i_feat = n_feat * ratio
    ks = jax.random.split(key, 8)
    we = 0.1 * jax.random.normal(ks[0], (i_feat, n_feat), jnp.float32)       # 1x1 (O, I)
    b0 = 0.1 * jax.random.normal(ks[1], (i_feat,), jnp.float32)
    wf = 0.1 * jax.random.normal(ks[2], (i_feat, i_feat, 3, 3), jnp.float32)  # OIHW
    b1 = 0.1 * jax.random.normal(ks[3], (i_feat,), jnp.float32)
    wr = 0.1 * jax.random.normal(ks[4], (n_feat, i_feat), jnp.float32)       # 1x1 (O, I)
    b2 = 0.1 * jax.random.normal(ks[5], (n_feat,), jnp.float32)
    # ASR: SE applied to the constant parameter tensor -> constant channel attention.
    w_se1 = 0.1 * jax.random.normal(ks[6], (i_feat // 4, i_feat), jnp.float32)
    w_se2 = 0.1 * jax.random.normal(ks[7], (i_feat, i_feat // 4), jnp.float32)
    t = 0.1 * jnp.ones((i_feat,), jnp.float32)     # ASR self.tensor
    h = t @ w_se1.T
    h = h * jax.nn.sigmoid(h)                      # SiLU
    attn = jax.nn.sigmoid(h @ w_se2.T)             # (IC,)
    return we, b0, wf, b1, wr, b2, attn


if __name__ == "__main__":
    B, C, H, W = 2, 4, 16, 16
    key = jax.random.PRNGKey(0)
    kx, kp = jax.random.split(key)
    x = jax.random.normal(kx, (B, C, H, W), jnp.float32)
    raw = make_params(kp, n_feat=C, ratio=2)

    y_ref = mbconv_reference(x, raw)

    # Exercise both the auto-selected single-tile path and the multi-row-tile
    # path (which uses the one-row halo inputs).
    for tr in (None, 8):
        y = jax.block_until_ready(mbconv_pallas(x, raw, tile_rows=tr))
        assert y.shape == (B, C, H, W)
        assert jnp.allclose(y, y_ref, atol=1e-4, rtol=1e-4), (
            tr, float(jnp.max(jnp.abs(y - y_ref))))

    print("KERNEL_OK")
</pallas_src>

<mosaic_0001>
module attributes {stable_mosaic.version = 11 : i64} {
  func.func @_mbconv_kernel(%arg0: i32, %arg1: i32, %arg2: memref<1x4x256xf32, #tpu.memory_space<vmem>>, %arg3: memref<1x1x4x16xf32, #tpu.memory_space<vmem>>, %arg4: memref<1x1x4x16xf32, #tpu.memory_space<vmem>>, %arg5: memref<8x4xf32, #tpu.memory_space<vmem>>, %arg6: memref<8x1xf32, #tpu.memory_space<vmem>>, %arg7: memref<8x72xf32, #tpu.memory_space<vmem>>, %arg8: memref<8x1xf32, #tpu.memory_space<vmem>>, %arg9: memref<4x8xf32, #tpu.memory_space<vmem>>, %arg10: memref<4x1xf32, #tpu.memory_space<vmem>>, %arg11: memref<1x4x256xf32, #tpu.memory_space<vmem>>, %arg12: memref<8x320xf32, #tpu.memory_space<vmem>>) attributes {dimension_semantics = [#tpu.dimension_semantics<parallel>, #tpu.dimension_semantics<parallel>], iteration_bounds = array<i64: 2, 1>, scalar_prefetch = 0 : i64, scratch_operands = 1 : i64, tpu.core_type = #tpu.core_type<tc>, window_params = [{transform_indices = @transform_0, window_bounds = array<i64: 1, 4, 256>}, {transform_indices = @transform_1, window_bounds = array<i64: 1, 1, 4, 16>}, {transform_indices = @transform_2, window_bounds = array<i64: 1, 1, 4, 16>}, {pipeline_mode = #tpu.pipeline_mode<synchronous>, transform_indices = @transform_3, window_bounds = array<i64: 8, 4>}, {pipeline_mode = #tpu.pipeline_mode<synchronous>, transform_indices = @transform_4, window_bounds = array<i64: 8, 1>}, {pipeline_mode = #tpu.pipeline_mode<synchronous>, transform_indices = @transform_5, window_bounds = array<i64: 8, 72>}, {pipeline_mode = #tpu.pipeline_mode<synchronous>, transform_indices = @transform_6, window_bounds = array<i64: 8, 1>}, {pipeline_mode = #tpu.pipeline_mode<synchronous>, transform_indices = @transform_7, window_bounds = array<i64: 4, 8>}, {pipeline_mode = #tpu.pipeline_mode<synchronous>, transform_indices = @transform_8, window_bounds = array<i64: 4, 1>}, {transform_indices = @transform_9, window_bounds = array<i64: 1, 4, 256>}]} {
    %c0 = arith.constant 0 : index
    %c0_0 = arith.constant 0 : index
    %c0_1 = arith.constant 0 : index
    %0 = vector.load %arg2[%c0, %c0_0, %c0_1] : memref<1x4x256xf32, #tpu.memory_space<vmem>>, vector<1x4x256xf32>
    %1 = vector.shape_cast %0 : vector<1x4x256xf32> to vector<4x256xf32>
    %c0_2 = arith.constant 0 : index
    %c0_3 = arith.constant 0 : index
    %2 = vector.load %arg5[%c0_2, %c0_3] : memref<8x4xf32, #tpu.memory_space<vmem>>, vector<8x4xf32>
    %c0_4 = arith.constant 0 : index
    %c0_5 = arith.constant 0 : index
    %3 = vector.load %arg6[%c0_4, %c0_5] : memref<8x1xf32, #tpu.memory_space<vmem>>, vector<8x1xf32>
    %cst = arith.constant dense<0.000000e+00> : vector<8x256xf32>
    %4 = tpu.matmul %2, %1, %cst {dimension_numbers = #tpu.dot_dimension_numbers<[1], [0], [0], [1], [0, 0, 1, 1], [], []>} : vector<8x4xf32>, vector<4x256xf32>, vector<8x256xf32> -> vector<8x256xf32>
    %5 = vector.broadcast %3 : vector<8x1xf32> to vector<8x256xf32>
    %6 = arith.addf %4, %5 : vector<8x256xf32>
    %c0_6 = arith.constant 0 : index
    %c0_7 = arith.constant 0 : index
    %c0_8 = arith.constant 0 : index
    %c0_9 = arith.constant 0 : index
    %7 = vector.load %arg3[%c0_6, %c0_7, %c0_8, %c0_9] : memref<1x1x4x16xf32, #tpu.memory_space<vmem>>, vector<1x1x4x16xf32>
    %8 = vector.shape_cast %7 : vector<1x1x4x16xf32> to vector<4x16xf32>
    %cst_10 = arith.constant dense<0.000000e+00> : vector<8x16xf32>
    %9 = tpu.matmul %2, %8, %cst_10 {dimension_numbers = #tpu.dot_dimension_numbers<[1], [0], [0], [1], [0, 0, 1, 1], [], []>} : vector<8x4xf32>, vector<4x16xf32>, vector<8x16xf32> -> vector<8x16xf32>
    %10 = vector.broadcast %3 : vector<8x1xf32> to vector<8x16xf32>
    %11 = arith.addf %9, %10 : vector<8x16xf32>
    %c0_11 = arith.constant 0 : index
    %c0_12 = arith.constant 0 : index
    %c0_13 = arith.constant 0 : index
    %c0_14 = arith.constant 0 : index
    %12 = vector.load %arg4[%c0_11, %c0_12, %c0_13, %c0_14] : memref<1x1x4x16xf32, #tpu.memory_space<vmem>>, vector<1x1x4x16xf32>
    %13 = vector.shape_cast %12 : vector<1x1x4x16xf32> to vector<4x16xf32>
    %cst_15 = arith.constant dense<0.000000e+00> : vector<8x16xf32>
    %14 = tpu.matmul %2, %13, %cst_15 {dimension_numbers = #tpu.dot_dimension_numbers<[1], [0], [0], [1], [0, 0, 1, 1], [], []>} : vector<8x4xf32>, vector<4x16xf32>, vector<8x16xf32> -> vector<8x16xf32>
    %15 = vector.broadcast %3 : vector<8x1xf32> to vector<8x16xf32>
    %16 = arith.addf %14, %15 : vector<8x16xf32>
    %17 = vector.shape_cast %3 : vector<8x1xf32> to vector<8x1xf32>
    %18 = vector.broadcast %17 : vector<8x1xf32> to vector<8x16xf32>
    %c0_16 = arith.constant 0 : index
    %c0_17 = arith.constant 0 : index
    %19 = vector.load %arg12[%c0_16, %c0_17] : memref<8x320xf32, #tpu.memory_space<vmem>>, vector<8x16xf32>
    tpu.vector_store %arg12[%c0_16, %c0_17], %18 {strides = array<i32>} : memref<8x320xf32, #tpu.memory_space<vmem>>, vector<8x16xf32>,
    %c0_18 = arith.constant 0 : index
    %c16 = arith.constant 16 : index
    %20 = vector.load %arg12[%c0_18, %c16] : memref<8x320xf32, #tpu.memory_space<vmem>>, vector<8x16xf32>
    tpu.vector_store %arg12[%c0_18, %c16], %11 {strides = array<i32>} : memref<8x320xf32, #tpu.memory_space<vmem>>, vector<8x16xf32>,
    %c0_19 = arith.constant 0 : index
    %c32 = arith.constant 32 : index
    %21 = vector.load %arg12[%c0_19, %c32] : memref<8x320xf32, #tpu.memory_space<vmem>>, vector<8x256xf32>
    tpu.vector_store %arg12[%c0_19, %c32], %6 {strides = array<i32>} : memref<8x320xf32, #tpu.memory_space<vmem>>, vector<8x256xf32>,
    %c0_20 = arith.constant 0 : index
    %c288 = arith.constant 288 : index
    %22 = vector.load %arg12[%c0_20, %c288] : memref<8x320xf32, #tpu.memory_space<vmem>>, vector<8x16xf32>
    tpu.vector_store %arg12[%c0_20, %c288], %16 {strides = array<i32>} : memref<8x320xf32, #tpu.memory_space<vmem>>, vector<8x16xf32>,
    %c0_21 = arith.constant 0 : index
    %c304 = arith.constant 304 : index
    %23 = vector.load %arg12[%c0_21, %c304] : memref<8x320xf32, #tpu.memory_space<vmem>>, vector<8x16xf32>
    tpu.vector_store %arg12[%c0_21, %c304], %18 {strides = array<i32>} : memref<8x320xf32, #tpu.memory_space<vmem>>, vector<8x16xf32>,
    %24 = tpu.iota {dimensions = array<i32: 1>} : vector<1x256xi32>
    %c16_i32 = arith.constant 16 : i32
    %c0_i32 = arith.constant 0 : i32
    %25 = arith.cmpi eq, %c16_i32, %c0_i32 : i32
    %c1_i32 = arith.constant 1 : i32
    %26 = arith.select %25, %c1_i32, %c16_i32 : i32
    %27 = vector.broadcast %26 : i32 to vector<1x256xi32>
    %28 = arith.remsi %24, %27 : vector<1x256xi32>
    %c0_i32_22 = arith.constant 0 : i32
    %29 = vector.broadcast %c0_i32_22 : i32 to vector<1x256xi32>
    %30 = arith.cmpi ne, %28, %29 : vector<1x256xi32>
    %c0_i32_23 = arith.constant 0 : i32
    %31 = vector.broadcast %c0_i32_23 : i32 to vector<1x256xi32>
    %32 = arith.cmpi slt, %28, %31 : vector<1x256xi32>
    %c0_i32_24 = arith.constant 0 : i32
    %33 = arith.cmpi slt, %26, %c0_i32_24 : i32
    %34 = vector.broadcast %33 : i1 to vector<1x256xi1>
    %35 = vector.broadcast %34 : vector<1x256xi1> to vector<1x256xi1>
    %36 = arith.xori %32, %35 : vector<1x256xi1>
    %37 = arith.andi %36, %30 : vector<1x256xi1>
    %38 = vector.broadcast %26 : i32 to vector<1x256xi32>
    %39 = arith.addi %28, %38 : vector<1x256xi32>
    %40 = arith.select %37, %39, %28 : vector<1x256xi1>, vector<1x256xi32>
    %c0_i32_25 = arith.constant 0 : i32
    %41 = vector.broadcast %c0_i32_25 : i32 to vector<1x256xi32>
    %42 = arith.cmpi sgt, %40, %41 : vector<1x256xi32>
    %c15_i32 = arith.constant 15 : i32
    %43 = vector.broadcast %c15_i32 : i32 to vector<1x256xi32>
    %44 = arith.cmpi slt, %40, %43 : vector<1x256xi32>
    %c0_26 = arith.constant 0 : index
    %c15 = arith.constant 15 : index
    %45 = vector.load %arg12[%c0_26, %c15] : memref<8x320xf32, #tpu.memory_space<vmem>>, vector<8x256xf32>
    %46 = vector.shape_cast %42 : vector<1x256xi1> to vector<1x256xi1>
    %47 = vector.broadcast %46 : vector<1x256xi1> to vector<8x256xi1>
    %48 = vector.shape_cast %3 : vector<8x1xf32> to vector<8x1xf32>
    %49 = vector.broadcast %48 : vector<8x1xf32> to vector<8x256xf32>
    %50 = arith.select %47, %45, %49 : vector<8x256xi1>, vector<8x256xf32>
    %c0_27 = arith.constant 0 : index
    %c16_28 = arith.constant 16 : index
    %51 = vector.load %arg12[%c0_27, %c16_28] : memref<8x320xf32, #tpu.memory_space<vmem>>, vector<8x256xf32>
    %c0_29 = arith.constant 0 : index
    %c17 = arith.constant 17 : index
    %52 = vector.load %arg12[%c0_29, %c17] : memref<8x320xf32, #tpu.memory_space<vmem>>, vector<8x256xf32>
    %53 = vector.shape_cast %44 : vector<1x256xi1> to vector<1x256xi1>
    %54 = vector.broadcast %53 : vector<1x256xi1> to vector<8x256xi1>
    %55 = vector.shape_cast %3 : vector<8x1xf32> to vector<8x1xf32>
    %56 = vector.broadcast %55 : vector<8x1xf32> to vector<8x256xf32>
    %57 = arith.select %54, %52, %56 : vector<8x256xi1>, vector<8x256xf32>
    %c0_30 = arith.constant 0 : index
    %c31 = arith.constant 31 : index
    %58 = vector.load %arg12[%c0_30, %c31] : memref<8x320xf32, #tpu.memory_space<vmem>>, vector<8x256xf32>
    %59 = vector.shape_cast %42 : vector<1x256xi1> to vector<1x256xi1>
    %60 = vector.broadcast %59 : vector<1x256xi1> to vector<8x256xi1>
    %61 = vector.shape_cast %3 : vector<8x1xf32> to vector<8x1xf32>
    %62 = vector.broadcast %61 : vector<8x1xf32> to vector<8x256xf32>
    %63 = arith.select %60, %58, %62 : vector<8x256xi1>, vector<8x256xf32>
    %c0_31 = arith.constant 0 : index
    %c32_32 = arith.constant 32 : index
    %64 = vector.load %arg12[%c0_31, %c32_32] : memref<8x320xf32, #tpu.memory_space<vmem>>, vector<8x256xf32>
    %c0_33 = arith.constant 0 : index
    %c33 = arith.constant 33 : index
    %65 = vector.load %arg12[%c0_33, %c33] : memref<8x320xf32, #tpu.memory_space<vmem>>, vector<8x256xf32>
    %66 = vector.shape_cast %44 : vector<1x256xi1> to vector<1x256xi1>
    %67 = vector.broadcast %66 : vector<1x256xi1> to vector<8x256xi1>
    %68 = vector.shape_cast %3 : vector<8x1xf32> to vector<8x1xf32>
    %69 = vector.broadcast %68 : vector<8x1xf32> to vector<8x256xf32>
    %70 = arith.select %67, %65, %69 : vector<8x256xi1>, vector<8x256xf32>
    %c0_34 = arith.constant 0 : index
    %c47 = arith.constant 47 : index
    %71 = vector.load %arg12[%c0_34, %c47] : memref<8x320xf32, #tpu.memory_space<vmem>>, vector<8x256xf32>
    %72 = vector.shape_cast %42 : vector<1x256xi1> to vector<1x256xi1>
    %73 = vector.broadcast %72 : vector<1x256xi1> to vector<8x256xi1>
    %74 = vector.shape_cast %3 : vector<8x1xf32> to vector<8x1xf32>
    %75 = vector.broadcast %74 : vector<8x1xf32> to vector<8x256xf32>
    %76 = arith.select %73, %71, %75 : vector<8x256xi1>, vector<8x256xf32>
    %c0_35 = arith.constant 0 : index
    %c48 = arith.constant 48 : index
    %77 = vector.load %arg12[%c0_35, %c48] : memref<8x320xf32, #tpu.memory_space<vmem>>, vector<8x256xf32>
    %c0_36 = arith.constant 0 : index
    %c49 = arith.constant 49 : index
    %78 = vector.load %arg12[%c0_36, %c49] : memref<8x320xf32, #tpu.memory_space<vmem>>, vector<8x256xf32>
    %79 = vector.shape_cast %44 : vector<1x256xi1> to vector<1x256xi1>
    %80 = vector.broadcast %79 : vector<1x256xi1> to vector<8x256xi1>
    %81 = vector.shape_cast %3 : vector<8x1xf32> to vector<8x1xf32>
    %82 = vector.broadcast %81 : vector<8x1xf32> to vector<8x256xf32>
    %83 = arith.select %80, %78, %82 : vector<8x256xi1>, vector<8x256xf32>
    %84 = tpu.concatenate %50, %51, %57, %63, %64, %70, %76, %77, %83 in 0 : vector<8x256xf32>, vector<8x256xf32>, vector<8x256xf32>, vector<8x256xf32>, vector<8x256xf32>, vector<8x256xf32>, vector<8x256xf32>, vector<8x256xf32>, vector<8x256xf32> -> vector<72x256xf32>
    %c0_37 = arith.constant 0 : index
    %c0_38 = arith.constant 0 : index
    %85 = vector.load %arg7[%c0_37, %c0_38] : memref<8x72xf32, #tpu.memory_space<vmem>>, vector<8x72xf32>
    %cst_39 = arith.constant dense<0.000000e+00> : vector<8x256xf32>
    %86 = tpu.matmul %85, %84, %cst_39 {dimension_numbers = #tpu.dot_dimension_numbers<[1], [0], [0], [1], [0, 0, 1, 1], [], []>} : vector<8x72xf32>, vector<72x256xf32>, vector<8x256xf32> -> vector<8x256xf32>
    %c0_40 = arith.constant 0 : index
    %c0_41 = arith.constant 0 : index
    %87 = vector.load %arg8[%c0_40, %c0_41] : memref<8x1xf32, #tpu.memory_space<vmem>>, vector<8x1xf32>
    %88 = vector.broadcast %87 : vector<8x1xf32> to vector<8x256xf32>
    %89 = arith.addf %86, %88 : vector<8x256xf32>
    %c0_42 = arith.constant 0 : index
    %c0_43 = arith.constant 0 : index
    %90 = vector.load %arg9[%c0_42, %c0_43] : memref<4x8xf32, #tpu.memory_space<vmem>>, vector<4x8xf32>
    %cst_44 = arith.constant dense<0.000000e+00> : vector<4x256xf32>
    %91 = tpu.matmul %90, %89, %cst_44 {dimension_numbers = #tpu.dot_dimension_numbers<[1], [0], [0], [1], [0, 0, 1, 1], [], []>} : vector<4x8xf32>, vector<8x256xf32>, vector<4x256xf32> -> vector<4x256xf32>
    %c0_45 = arith.constant 0 : index
    %c0_46 = arith.constant 0 : index
    %92 = vector.load %arg10[%c0_45, %c0_46] : memref<4x1xf32, #tpu.memory_space<vmem>>, vector<4x1xf32>
    %93 = vector.broadcast %92 : vector<4x1xf32> to vector<4x256xf32>
    %94 = arith.addf %91, %93 : vector<4x256xf32>
    %95 = arith.addf %94, %1 : vector<4x256xf32>
    %c0_47 = arith.constant 0 : index
    %c0_48 = arith.constant 0 : index
    %c0_49 = arith.constant 0 : index
    %96 = vector.load %arg11[%c0_47, %c0_48, %c0_49] : memref<1x4x256xf32, #tpu.memory_space<vmem>>, vector<1x4x256xf32>
    %97 = vector.shape_cast %96 : vector<1x4x256xf32> to vector<4x256xf32>
    %98 = vector.shape_cast %95 : vector<4x256xf32> to vector<1x4x256xf32>
    tpu.vector_store %arg11[%c0_47, %c0_48, %c0_49], %98 {strides = array<i32>} : memref<1x4x256xf32, #tpu.memory_space<vmem>>, vector<1x4x256xf32>,
    return
  }
  func.func @transform_0(%arg0: i32, %arg1: i32) -> (i32, i32, i32) {
    %c0_i32 = arith.constant 0 : i32
    %c0_i32_0 = arith.constant 0 : i32
    return %arg0, %c0_i32, %arg1 : i32, i32, i32
  }
  func.func @transform_1(%arg0: i32, %arg1: i32) -> (i32, i32, i32, i32) {
    %c0_i32 = arith.constant 0 : i32
    %c0_i32_0 = arith.constant 0 : i32
    %c0_i32_1 = arith.constant 0 : i32
    return %arg0, %arg1, %c0_i32, %c0_i32_0 : i32, i32, i32, i32
  }
  func.func @transform_2(%arg0: i32, %arg1: i32) -> (i32, i32, i32, i32) {
    %c0_i32 = arith.constant 0 : i32
    %c0_i32_0 = arith.constant 0 : i32
    %c0_i32_1 = arith.constant 0 : i32
    return %arg0, %arg1, %c0_i32, %c0_i32_0 : i32, i32, i32, i32
  }
  func.func @transform_3(%arg0: i32, %arg1: i32) -> (i32, i32) {
    %c0_i32 = arith.constant 0 : i32
    %c0_i32_0 = arith.constant 0 : i32
    %c0_i32_1 = arith.constant 0 : i32
    return %c0_i32, %c0_i32_0 : i32, i32
  }
  func.func @transform_4(%arg0: i32, %arg1: i32) -> (i32, i32) {
    %c0_i32 = arith.constant 0 : i32
    %c0_i32_0 = arith.constant 0 : i32
    %c0_i32_1 = arith.constant 0 : i32
    return %c0_i32, %c0_i32_0 : i32, i32
  }
  func.func @transform_5(%arg0: i32, %arg1: i32) -> (i32, i32) {
    %c0_i32 = arith.constant 0 : i32
    %c0_i32_0 = arith.constant 0 : i32
    %c0_i32_1 = arith.constant 0 : i32
    return %c0_i32, %c0_i32_0 : i32, i32
  }
  func.func @transform_6(%arg0: i32, %arg1: i32) -> (i32, i32) {
    %c0_i32 = arith.constant 0 : i32
    %c0_i32_0 = arith.constant 0 : i32
    %c0_i32_1 = arith.constant 0 : i32
    return %c0_i32, %c0_i32_0 : i32, i32
  }
  func.func @transform_7(%arg0: i32, %arg1: i32) -> (i32, i32) {
    %c0_i32 = arith.constant 0 : i32
    %c0_i32_0 = arith.constant 0 : i32
    %c0_i32_1 = arith.constant 0 : i32
    return %c0_i32, %c0_i32_0 : i32, i32
  }
  func.func @transform_8(%arg0: i32, %arg1: i32) -> (i32, i32) {
    %c0_i32 = arith.constant 0 : i32
    %c0_i32_0 = arith.constant 0 : i32
    %c0_i32_1 = arith.constant 0 : i32
    return %c0_i32, %c0_i32_0 : i32, i32
  }
  func.func @transform_9(%arg0: i32, %arg1: i32) -> (i32, i32, i32) {
    %c0_i32 = arith.constant 0 : i32
    %c0_i32_0 = arith.constant 0 : i32
    return %arg0, %c0_i32, %arg1 : i32, i32, i32
  }
}

</mosaic_0001>

<llo_original>
// kernel: tpu_custom_call.1
$region0: #{tpu_custom_call.1}
  #allocation0 [shape = 'u32[]', space=smem, size = 0x4, offset = 0x4, fixed_abs, tag = 'smem constant byte address 0x4 - core index']
  #allocation1 [shape = 'u32[144,128]{1,0:T(1,128)}', space=vmem, size = 0x12000, scoped, tag = 'internal scratch']
  #allocation2 [shape = 'f32[8,320]{1,0:T(8,128)}', space=vmem, size = 0x3000, scoped, tag = 'scratch operand']
  %s0 = inlined_call_operand.hbm [shape: f32[2,4,256], index: 0, kind: input, shape index: {}, may-alias: {0,9}]
  %s1 = inlined_call_operand.vmem [shape: f32[2,1,4,16], index: 1, kind: input, shape index: {}]
  %s2 = inlined_call_operand.vmem [shape: f32[2,1,4,16], index: 2, kind: input, shape index: {}]
  %s3 = inlined_call_operand.vmem [shape: f32[8,4], index: 3, kind: input, shape index: {}]
  %s4 = inlined_call_operand.vmem [shape: f32[8,1], index: 4, kind: input, shape index: {}]
  %s5 = inlined_call_operand.vmem [shape: f32[8,72], index: 5, kind: input, shape index: {}]
  %s6 = inlined_call_operand.vmem [shape: f32[8,1], index: 6, kind: input, shape index: {}]
  %s7 = inlined_call_operand.vmem [shape: f32[4,8], index: 7, kind: input, shape index: {}]
  %s8 = inlined_call_operand.vmem [shape: f32[4,1], index: 8, kind: input, shape index: {}]
  %s9 = inlined_call_operand.hbm [shape: f32[2,4,256], index: 9, kind: output, shape index: {}, may-alias: {0,9}]
  %s10 = sld [smem:[#allocation0]]
  $region73: #{tpu_custom_call.1} parent=0
    _
  %s12 = ssub.s32 1, %s10
  %s13 = scalar_select 0, %s12, %s10
  $region1: #{tpu_custom_call.1} parent=0
    #allocation3 [shape = 'u8[8192]{0}', space=vmem, size = 0x2000, scoped, tag = 'input window, operand 0']
    #allocation4 [shape = 's32[2]{0}', space=sflag, size = 0x8, scoped, tag = 'scoped memory for tpu_custom_call.1']
    #allocation5 [shape = 's32[2]{0}', space=sflag, size = 0x8, scoped, tag = 'scoped memory for tpu_custom_call.1']
    #allocation6 [shape = 'u8[8192]{0}', space=vmem, size = 0x2000, scoped, tag = 'output window, operand 0']
    %14 = vsyncpa [#allocation4], 0
    %s15 = scalar_lea.sflag [#allocation4], 1
    %16 = vsyncpa %s15, 0
    %17 = vsyncpa [#allocation5], 0
    %s18 = scalar_lea.sflag [#allocation5], 1
    %19 = vsyncpa %s18, 0
    loop: start=0, step=1, limit=4
    $region2: #{tpu_custom_call.1} parent=1 // loop_pre_header
      _
    $region3: #{tpu_custom_call.1} parent=1 // loop_header
      %s21 = sphi 0, %s25
      %p22 = scmp.ge.s32.totalorder %s21, 4
      %s28 = sphi 0, %s40
      %s29 = sphi 0, %s36
      %s30 = sphi 0, %s28
      %s31 = sphi 0, %s29
      %s32 = sphi 0, %s30
      %s33 = sphi 0, %s31
      %s45 = sphi 0, %s47
      %s48 = sphi 0, %s45
      %s49 = sphi 0, %s48
      %s65 = sphi 0, %s49
      %s73 = sphi 0, %s75
      %s76 = sphi 0, %s73
      %s77 = sphi 0, %s76
      %s93 = sphi 0, %s77
      %s101 = sphi 0, %s103
      %s104 = sphi 0, %s101
      %s105 = sphi 0, %s104
      %s121 = sphi 0, %s105
      %s125 = sphi 0, %s125
      %s127 = sphi 0, %s125
      %s128 = sphi 0, %s127
      %s142 = sphi 0, %s128
      %s146 = sphi 0, %s146
      %s148 = sphi 0, %s146
      %s149 = sphi 0, %s148
      %s163 = sphi 0, %s149
      %s167 = sphi 0, %s167
      %s169 = sphi 0, %s167
      %s170 = sphi 0, %s169
      %s184 = sphi 0, %s170
      %s188 = sphi 0, %s188
      %s190 = sphi 0, %s188
      %s191 = sphi 0, %s190
      %s205 = sphi 0, %s191
      %s209 = sphi 0, %s209
      %s211 = sphi 0, %s209
      %s212 = sphi 0, %s211
      %s226 = sphi 0, %s212
      %s230 = sphi 0, %s230
      %s232 = sphi 0, %s230
      %s233 = sphi 0, %s232
      %s247 = sphi 0, %s233
      %s255 = sphi 0, %s257
      %s258 = sphi 0, %s255
      %s259 = sphi 0, %s258
      %s275 = sphi 0, %s259
    $region4: #{tpu_custom_call.1} parent=1 // loop_header_branch
      %24 = sbr.rel (%p22) target = $region8
    $region5: #{tpu_custom_call.1} parent=1 // loop_body
      %s26 = ssub.s32 %s21, 1
      %s27 = ssub.s32 %s21, 2
      %s34 = sadd.s32 1, %s29
      %p35 = scmp.ge.s32.totalorder %s34, 1
      %s36 = scalar_select %p35, 0, %s34
      %s37 = sadd.s32 1, %s28
      %s38 = scalar_select %p35, %s37, %s28
      %p39 = scmp.ge.s32.totalorder %s38, 2
      %s40 = scalar_select %p39, 0, %s38
      %s41 = ssub.s32 %s28, %s40
      %s42 = ssub.s32 %s29, %s36
      %s43 = sor.u32 %s41, %s42
      %p44 = scmp.eq.s32.totalorder %s43, 0
      %s46 = sadd.s32 %s45, 1
      %s47 = scalar_select %p44, %s45, %s46
      %p50 = pneg %p44
      %p51 = scmp.eq.s32.totalorder %s21, 1
      %p52 = por %p50, %p51
      %p53 = scmp.ne.s32.totalorder %s45, %s48
      %p54 = scmp.eq.s32.totalorder %s21, 0
      %p55 = por %p53, %p54
      %p56 = scmp.ne.s32.totalorder %s45, %s48
      %p57 = scmp.eq.s32.totalorder %s26, 1
      %p58 = por %p56, %p57
      %p59 = scmp.ne.s32.totalorder %s48, %s49
      %p60 = scmp.eq.s32.totalorder %s26, 0
      %p61 = por %p59, %p60
      %p62 = scmp.ne.s32.totalorder %s48, %s49
      %p63 = scmp.eq.s32.totalorder %s27, 1
      %p64 = por %p62, %p63
      %p66 = scmp.ne.s32.totalorder %s49, %s65
      %p67 = scmp.eq.s32.totalorder %s27, 0
      %p68 = por %p66, %p67
      %s69 = ssub.s32 %s28, %s40
      %s70 = ssub.s32 %s29, %s36
      %s71 = sor.u32 %s69, %s70
      %p72 = scmp.eq.s32.totalorder %s71, 0
      %s74 = sadd.s32 %s73, 1
      %s75 = scalar_select %p72, %s73, %s74
      %p78 = pneg %p72
      %p79 = scmp.eq.s32.totalorder %s21, 1
      %p80 = por %p78, %p79
      %p81 = scmp.ne.s32.totalorder %s73, %s76
      %p82 = scmp.eq.s32.totalorder %s21, 0
      %p83 = por %p81, %p82
      %p84 = scmp.ne.s32.totalorder %s73, %s76
      %p85 = scmp.eq.s32.totalorder %s26, 1
      %p86 = por %p84, %p85
      %p87 = scmp.ne.s32.totalorder %s76, %s77
      %p88 = scmp.eq.s32.totalorder %s26, 0
      %p89 = por %p87, %p88
      %p90 = scmp.ne.s32.totalorder %s76, %s77
      %p91 = scmp.eq.s32.totalorder %s27, 1
      %p92 = por %p90, %p91
      %p94 = scmp.ne.s32.totalorder %s77, %s93
      %p95 = scmp.eq.s32.totalorder %s27, 0
      %p96 = por %p94, %p95
      %s97 = ssub.s32 %s28, %s40
      %s98 = ssub.s32 %s29, %s36
      %s99 = sor.u32 %s97, %s98
      %p100 = scmp.eq.s32.totalorder %s99, 0
      %s102 = sadd.s32 %s101, 1
      %s103 = scalar_select %p100, %s101, %s102
      %p106 = pneg %p100
      %p107 = scmp.eq.s32.totalorder %s21, 1
      %p108 = por %p106, %p107
      %p109 = scmp.ne.s32.totalorder %s101, %s104
      %p110 = scmp.eq.s32.totalorder %s21, 0
      %p111 = por %p109, %p110
      %p112 = scmp.ne.s32.totalorder %s101, %s104
      %p113 = scmp.eq.s32.totalorder %s26, 1
      %p114 = por %p112, %p113
      %p115 = scmp.ne.s32.totalorder %s104, %s105
      %p116 = scmp.eq.s32.totalorder %s26, 0
      %p117 = por %p115, %p116
      %p118 = scmp.ne.s32.totalorder %s104, %s105
      %p119 = scmp.eq.s32.totalorder %s27, 1
      %p120 = por %p118, %p119
      %p122 = scmp.ne.s32.totalorder %s105, %s121
      %p123 = scmp.eq.s32.totalorder %s27, 0
      %p124 = por %p122, %p123
      %s126 = sadd.s32 %s125, 1
      %p129 = scmp.eq.s32.totalorder %s21, 1
      %p130 = scmp.ne.s32.totalorder %s125, %s127
      %p131 = scmp.eq.s32.totalorder %s21, 0
      %p132 = por %p130, %p131
      %p133 = scmp.ne.s32.totalorder %s125, %s127
      %p134 = scmp.eq.s32.totalorder %s26, 1
      %p135 = por %p133, %p134
      %p136 = scmp.ne.s32.totalorder %s127, %s128
      %p137 = scmp.eq.s32.totalorder %s26, 0
      %p138 = por %p136, %p137
      %p139 = scmp.ne.s32.totalorder %s127, %s128
      %p140 = scmp.eq.s32.totalorder %s27, 1
      %p141 = por %p139, %p140
      %p143 = scmp.ne.s32.totalorder %s128, %s142
      %p144 = scmp.eq.s32.totalorder %s27, 0
      %p145 = por %p143, %p144
      %s147 = sadd.s32 %s146, 1
      %p150 = scmp.eq.s32.totalorder %s21, 1
      %p151 = scmp.ne.s32.totalorder %s146, %s148
      %p152 = scmp.eq.s32.totalorder %s21, 0
      %p153 = por %p151, %p152
      %p154 = scmp.ne.s32.totalorder %s146, %s148
      %p155 = scmp.eq.s32.totalorder %s26, 1
      %p156 = por %p154, %p155
      %p157 = scmp.ne.s32.totalorder %s148, %s149
      %p158 = scmp.eq.s32.totalorder %s26, 0
      %p159 = por %p157, %p158
      %p160 = scmp.ne.s32.totalorder %s148, %s149
      %p161 = scmp.eq.s32.totalorder %s27, 1
      %p162 = por %p160, %p161
      %p164 = scmp.ne.s32.totalorder %s149, %s163
      %p165 = scmp.eq.s32.totalorder %s27, 0
      %p166 = por %p164, %p165
      %s168 = sadd.s32 %s167, 1
      %p171 = scmp.eq.s32.totalorder %s21, 1
      %p172 = scmp.ne.s32.totalorder %s167, %s169
      %p173 = scmp.eq.s32.totalorder %s21, 0
      %p174 = por %p172, %p173
      %p175 = scmp.ne.s32.totalorder %s167, %s169
      %p176 = scmp.eq.s32.totalorder %s26, 1
      %p177 = por %p175, %p176
      %p178 = scmp.ne.s32.totalorder %s169, %s170
      %p179 = scmp.eq.s32.totalorder %s26, 0
      %p180 = por %p178, %p179
      %p181 = scmp.ne.s32.totalorder %s169, %s170
      %p182 = scmp.eq.s32.totalorder %s27, 1
      %p183 = por %p181, %p182
      %p185 = scmp.ne.s32.totalorder %s170, %s184
      %p186 = scmp.eq.s32.totalorder %s27, 0
      %p187 = por %p185, %p186
      %s189 = sadd.s32 %s188, 1
      %p192 = scmp.eq.s32.totalorder %s21, 1
      %p193 = scmp.ne.s32.totalorder %s188, %s190
      %p194 = scmp.eq.s32.totalorder %s21, 0
      %p195 = por %p193, %p194
      %p196 = scmp.ne.s32.totalorder %s188, %s190
      %p197 = scmp.eq.s32.totalorder %s26, 1
      %p198 = por %p196, %p197
      %p199 = scmp.ne.s32.totalorder %s190, %s191
      %p200 = scmp.eq.s32.totalorder %s26, 0
      %p201 = por %p199, %p200
      %p202 = scmp.ne.s32.totalorder %s190, %s191
      %p203 = scmp.eq.s32.totalorder %s27, 1
      %p204 = por %p202, %p203
      %p206 = scmp.ne.s32.totalorder %s191, %s205
      %p207 = scmp.eq.s32.totalorder %s27, 0
      %p208 = por %p206, %p207
      %s210 = sadd.s32 %s209, 1
      %p213 = scmp.eq.s32.totalorder %s21, 1
      %p214 = scmp.ne.s32.totalorder %s209, %s211
      %p215 = scmp.eq.s32.totalorder %s21, 0
      %p216 = por %p214, %p215
      %p217 = scmp.ne.s32.totalorder %s209, %s211
      %p218 = scmp.eq.s32.totalorder %s26, 1
      %p219 = por %p217, %p218
      %p220 = scmp.ne.s32.totalorder %s211, %s212
      %p221 = scmp.eq.s32.totalorder %s26, 0
      %p222 = por %p220, %p221
      %p223 = scmp.ne.s32.totalorder %s211, %s212
      %p224 = scmp.eq.s32.totalorder %s27, 1
      %p225 = por %p223, %p224
      %p227 = scmp.ne.s32.totalorder %s212, %s226
      %p228 = scmp.eq.s32.totalorder %s27, 0
      %p229 = por %p227, %p228
      %s231 = sadd.s32 %s230, 1
      %p234 = scmp.eq.s32.totalorder %s21, 1
      %p235 = scmp.ne.s32.totalorder %s230, %s232
      %p236 = scmp.eq.s32.totalorder %s21, 0
      %p237 = por %p235, %p236
      %p238 = scmp.ne.s32.totalorder %s230, %s232
      %p239 = scmp.eq.s32.totalorder %s26, 1
      %p240 = por %p238, %p239
      %p241 = scmp.ne.s32.totalorder %s232, %s233
      %p242 = scmp.eq.s32.totalorder %s26, 0
      %p243 = por %p241, %p242
      %p244 = scmp.ne.s32.totalorder %s232, %s233
      %p245 = scmp.eq.s32.totalorder %s27, 1
      %p246 = por %p244, %p245
      %p248 = scmp.ne.s32.totalorder %s233, %s247
      %p249 = scmp.eq.s32.totalorder %s27, 0
      %p250 = por %p248, %p249
      %s251 = ssub.s32 %s28, %s40
      %s252 = ssub.s32 %s29, %s36
      %s253 = sor.u32 %s251, %s252
      %p254 = scmp.eq.s32.totalorder %s253, 0
      %s256 = sadd.s32 %s255, 1
      %s257 = scalar_select %p254, %s255, %s256
      %p260 = pneg %p254
      %p261 = scmp.eq.s32.totalorder %s21, 1
      %p262 = por %p260, %p261
      %p263 = scmp.ne.s32.totalorder %s255, %s258
      %p264 = scmp.eq.s32.totalorder %s21, 0
      %p265 = por %p263, %p264
      %p266 = scmp.ne.s32.totalorder %s255, %s258
      %p267 = scmp.eq.s32.totalorder %s26, 1
      %p268 = por %p266, %p267
      %p269 = scmp.ne.s32.totalorder %s258, %s259
      %p270 = scmp.eq.s32.totalorder %s26, 0
      %p271 = por %p269, %p270
      %p272 = scmp.ne.s32.totalorder %s258, %s259
      %p273 = scmp.eq.s32.totalorder %s27, 1
      %p274 = por %p272, %p273
      %p276 = scmp.ne.s32.totalorder %s259, %s275
      %p277 = scmp.eq.s32.totalorder %s27, 0
      %p278 = por %p276, %p277
      %p279 = scmp.le.s32.totalorder 1, %s21
      %p280 = scmp.lt.s32.totalorder %s21, 3
      %p281 = pnand %p279, %p280
      %p282 = pneg %p281
      // Predicated region
      $region9: #{tpu_custom_call.1} parent=5 // pred_check
        _
      $region10: #{tpu_custom_call.1} parent=5 // pred_check_branch
        %284 = sbr.rel (%p281) target = $region12
      $region11: #{tpu_custom_call.1} parent=5 // pred_region
        %s285 = ssub.s32 %s21, 1
        // Predicated region
        $region13: #{tpu_custom_call.1} parent=11 // pred_check
          %p286 = pneg %p138
        $region14: #{tpu_custom_call.1} parent=11 // pred_check_branch
          %288 = sbr.rel (%p286) target = $region16
        $region15: #{tpu_custom_call.1} parent=11 // pred_region
          _
        $region16: #{tpu_custom_call.1} parent=11 // pred_fallthru
          _
        // Predicated region
        $region17: #{tpu_custom_call.1} parent=11 // pred_check
          %p289 = pneg %p159
        $region18: #{tpu_custom_call.1} parent=11 // pred_check_branch
          %291 = sbr.rel (%p289) target = $region20
        $region19: #{tpu_custom_call.1} parent=11 // pred_region
          _
        $region20: #{tpu_custom_call.1} parent=11 // pred_fallthru
          _
        // Predicated region
        $region21: #{tpu_custom_call.1} parent=11 // pred_check
          %p292 = pneg %p180
        $region22: #{tpu_custom_call.1} parent=11 // pred_check_branch
          %294 = sbr.rel (%p292) target = $region24
        $region23: #{tpu_custom_call.1} parent=11 // pred_region
          _
        $region24: #{tpu_custom_call.1} parent=11 // pred_fallthru
          _
        // Predicated region
        $region25: #{tpu_custom_call.1} parent=11 // pred_check
          %p295 = pneg %p201
        $region26: #{tpu_custom_call.1} parent=11 // pred_check_branch
          %297 = sbr.rel (%p295) target = $region28
        $region27: #{tpu_custom_call.1} parent=11 // pred_region
          _
        $region28: #{tpu_custom_call.1} parent=11 // pred_fallthru
          _
        // Predicated region
        $region29: #{tpu_custom_call.1} parent=11 // pred_check
          %p298 = pneg %p222
        $region30: #{tpu_custom_call.1} parent=11 // pred_check_branch
          %300 = sbr.rel (%p298) target = $region32
        $region31: #{tpu_custom_call.1} parent=11 // pred_region
          _
        $region32: #{tpu_custom_call.1} parent=11 // pred_fallthru
          _
        // Predicated region
        $region33: #{tpu_custom_call.1} parent=11 // pred_check
          %p301 = pneg %p243
        $region34: #{tpu_custom_call.1} parent=11 // pred_check_branch
          %303 = sbr.rel (%p301) target = $region36
        $region35: #{tpu_custom_call.1} parent=11 // pred_region
          _
        $region36: #{tpu_custom_call.1} parent=11 // pred_fallthru
          _
      $region12: #{tpu_custom_call.1} parent=5 // pred_fallthru
        _
      %p304 = scmp.lt.s32.totalorder %s21, 2
      // Predicated region
      $region37: #{tpu_custom_call.1} parent=5 // pred_check
        %p305 = pneg %p304
      $region38: #{tpu_custom_call.1} parent=5 // pred_check_branch
        %307 = sbr.rel (%p305) target = $region40
      $region39: #{tpu_custom_call.1} parent=5 // pred_region
        // Predicated region
        $region41: #{tpu_custom_call.1} parent=39 // pred_check
          %p308 = pneg %p55
        $region42: #{tpu_custom_call.1} parent=39 // pred_check_branch
          %310 = sbr.rel (%p308) target = $region44
        $region43: #{tpu_custom_call.1} parent=39 // pred_region
          %s311 = sand.u32 %s45, 1
          %s312 = scalar_lea.sflag [#allocation4], %s311
          %s313 = sand.u32 %s45, 1
          %s314 = smul.addr %s313, 8
          %s315 = scalar_lea.vmem [#allocation3], %s314
          %s316 = smul.u32 2, %s29
          %s318 = ssub.s32 128, 128
          %319 = vsyncadd %s312, %s318
          %s320 = smul.addr %s28, 2
          %s321 = sadd.s32 %s316, %s320
          %s322 = smul.addr %s321, 64
          %s323 = scalar_lea.hbm %s0, %s322
          %s325 = sshll.u32 %s315, 4
          %s326 = int_to_ptr.vmem [resolvable:$true] %s325
          %328 = dma.hbm_to_vmem [thread:$0]  %s323, 128, %s326, %s312
        $region44: #{tpu_custom_call.1} parent=39 // pred_fallthru
          _
        // Predicated region
        $region45: #{tpu_custom_call.1} parent=39 // pred_check
          %p329 = pneg %p83
        $region46: #{tpu_custom_call.1} parent=39 // pred_check_branch
          %331 = sbr.rel (%p329) target = $region48
        $region47: #{tpu_custom_call.1} parent=39 // pred_region
          %p332 = scmp.lt.s32.totalorder %s28, 1
          %s333 = scalar_select %p332, %s28, 1
          %p334 = scmp.lt.s32.totalorder %s29, 0
          %s335 = scalar_select %p334, %s29, 0
          %s336 = sadd.s32 %s335, %s333
          %s337 = smul.addr %s336, 4
          %s338 = scalar_lea.vmem %s1, %s337
        $region48: #{tpu_custom_call.1} parent=39 // pred_fallthru
          _
        // Predicated region
        $region49: #{tpu_custom_call.1} parent=39 // pred_check
          %p339 = pneg %p111
        $region50: #{tpu_custom_call.1} parent=39 // pred_check_branch
          %341 = sbr.rel (%p339) target = $region52
        $region51: #{tpu_custom_call.1} parent=39 // pred_region
          %p342 = scmp.lt.s32.totalorder %s28, 1
          %s343 = scalar_select %p342, %s28, 1
          %p344 = scmp.lt.s32.totalorder %s29, 0
          %s345 = scalar_select %p344, %s29, 0
          %s346 = sadd.s32 %s345, %s343
          %s347 = smul.addr %s346, 4
          %s348 = scalar_lea.vmem %s2, %s347
        $region52: #{tpu_custom_call.1} parent=39 // pred_fallthru
          _
      $region40: #{tpu_custom_call.1} parent=5 // pred_fallthru
        _
      %p349 = scmp.le.s32.totalorder 1, %s21
      %p350 = scmp.lt.s32.totalorder %s21, 3
      %p351 = pnand %p349, %p350
      %p352 = pneg %p351
      // Predicated region
      $region53: #{tpu_custom_call.1} parent=5 // pred_check
        _
      $region54: #{tpu_custom_call.1} parent=5 // pred_check_branch
        %354 = sbr.rel (%p351) target = $region56
      $region55: #{tpu_custom_call.1} parent=5 // pred_region
        %s355 = ssub.s32 %s21, 1
        %s356 = sand.u32 %s48, 1
        %s357 = scalar_lea.sflag [#allocation4], %s356
        %s358 = sand.u32 %s48, 1
        %s359 = smul.addr %s358, 8
        %s360 = scalar_lea.vmem [#allocation3], %s359
        // Predicated region
        $region57: #{tpu_custom_call.1} parent=55 // pred_check
          %p361 = pneg %p61
        $region58: #{tpu_custom_call.1} parent=55 // pred_check_branch
          %363 = sbr.rel (%p361) target = $region60
        $region59: #{tpu_custom_call.1} parent=55 // pred_region
          %364 = dma.done %s357, 128
        $region60: #{tpu_custom_call.1} parent=55 // pred_fallthru
          _
        %s365 = sand.u32 %s48, 1
        %s366 = scalar_lea.sflag [#allocation4], %s365
        %s367 = sand.u32 %s48, 1
        %s368 = smul.addr %s367, 8
        %s369 = scalar_lea.vmem [#allocation3], %s368
        %p370 = pneg %p61
        %p371 = pneg %p58
        %p372 = scmp.lt.s32.totalorder %s30, 1
        %s373 = scalar_select %p372, %s30, 1
        %p374 = scmp.lt.s32.totalorder %s31, 0
        %s375 = scalar_select %p374, %s31, 0
        %s376 = sadd.s32 %s375, %s373
        %s377 = smul.addr %s376, 4
        %s378 = scalar_lea.vmem %s1, %s377
        %p379 = pneg %p89
        %p380 = pneg %p86
        %p381 = scmp.lt.s32.totalorder %s30, 1
        %s382 = scalar_select %p381, %s30, 1
        %p383 = scmp.lt.s32.totalorder %s31, 0
        %s384 = scalar_select %p383, %s31, 0
        %s385 = sadd.s32 %s384, %s382
        %s386 = smul.addr %s385, 4
        %s387 = scalar_lea.vmem %s2, %s386
        %p388 = pneg %p117
        %p389 = pneg %p114
        %p390 = pneg %p138
        %p391 = pneg %p135
        %p392 = pneg %p159
        %p393 = pneg %p156
        %p394 = pneg %p180
        %p395 = pneg %p177
        %p396 = pneg %p201
        %p397 = pneg %p198
        %p398 = pneg %p222
        %p399 = pneg %p219
        %p400 = pneg %p243
        %p401 = pneg %p240
        %p402 = pneg %p271
        %p403 = pneg %p268
        %s404 = sand.u32 %s258, 1
        %s405 = scalar_lea.sflag [#allocation5], %s404
        %s406 = sand.u32 %s258, 1
        %s407 = smul.addr %s406, 8
        %s408 = scalar_lea.vmem [#allocation6], %s407
        %s409 = smul.u32 2, %s31
        %p410 = scmp.lt.s32.totalorder %s30, 1
        %s411 = scalar_select %p410, %s30, 1
        %p412 = scmp.lt.s32.totalorder %s31, 0
        %s413 = scalar_select %p412, %s31, 0
        %s414 = sadd.s32 %s413, %s411
        %s415 = smul.addr %s414, 4
        %s416 = scalar_lea.vmem %s1, %s415
        %p417 = scmp.lt.s32.totalorder %s30, 1
        %s418 = scalar_select %p417, %s30, 1
        %p419 = scmp.lt.s32.totalorder %s31, 0
        %s420 = scalar_select %p419, %s31, 0
        %s421 = sadd.s32 %s420, %s418
        %s422 = smul.addr %s421, 4
        %s423 = scalar_lea.vmem %s2, %s422
        %s424 = smul.u32 2, %s31
        %v425 = vld [vmem:[%s360] sm:$0xff]
        %v426 = vld [vmem:[%s3] sm:$0xff]
        %v427 = vld [vmem:[%s4] sm:$0xff]
        %429 = vset.pattern.permute.xlu0 0
        %430 = vperm.xlu0 %429, %v427
        %v431 = vpop.permute.xlu0 %430
        %v434 = vcombine.high %v425, %v425
        %vm435 = vcmask 31744
        %v437 = vsel %vm435, %v426, 0
        %vm439 = vcmask 1043456
        %v440 = vsel %vm439, %v425, 0
        %v442 = vsel %vm439, %v434, 0
        %444 = vmatprep.subr.mxu0 0.0
        %445 = vmatpush1.msra.mxu0 0.0
        %446 = vmatprep.subr.mxu0 0.0
        %447 = vmatpush1.msra.mxu0 0.0
        %448 = vmatprep.subr.mxu0 0.0
        %449 = vmatpush1.msra.mxu0 0.0
        %450 = vmatprep.subr.mxu0 0.0
        %451 = vmatpush1.msra.mxu0 0.0
        %452 = vmatprep.subr.mxu0 0.0
        %453 = vmatpush1.msra.mxu0 0.0
        %454 = vmatprep.subr.mxu0 0.0
        %455 = vmatpush1.msra.mxu0 0.0
        %456 = vmatprep.subr.mxu0 0.0
        %457 = vmatpush1.msra.mxu0 0.0
        %458 = vmatprep.subr.mxu0 0.0
        %459 = vmatpush1.msra.mxu0 0.0
        %460 = vmatprep.subr.mxu0 0.0
        %461 = vmatpush1.msra.mxu0 0.0
        %462 = vmatprep.subr.mxu0 0.0
        %463 = vmatpush1.msra.mxu0 0.0
        %464 = vmatprep.subr.mxu0 0.0
        %465 = vmatpush1.msra.mxu0 0.0
        %466 = vmatprep.subr.mxu0 0.0
        %467 = vmatpush1.msra.mxu0 0.0
        %468 = vmatprep.subr.mxu0 0.0
        %469 = vmatpush1.msra.mxu0 0.0
        %470 = vmatprep.subr.mxu0 0.0
        %471 = vmatpush1.msra.mxu0 0.0
        %472 = vmatprep.subr.mxu0 0.0
        %473 = vmatpush1.msra.mxu0 0.0
        %474 = vmatprep.subr.mxu0 %v442
        %475 = vmatpush1.msra.mxu0 %v440
        %476 = vmatprep.subr.mxu0 0.0
        %477 = vmatpush2.msra.mxu0 0.0
        %478 = vmatprep.subr.mxu0 0.0
        %479 = vmatpush2.msra.mxu0 0.0
        %480 = vmatprep.subr.mxu0 0.0
        %481 = vmatpush2.msra.mxu0 0.0
        %482 = vmatprep.subr.mxu0 0.0
        %483 = vmatpush2.msra.mxu0 0.0
        %484 = vmatprep.subr.mxu0 0.0
        %485 = vmatpush2.msra.mxu0 0.0
        %486 = vmatprep.subr.mxu0 0.0
        %487 = vmatpush2.msra.mxu0 0.0
        %488 = vmatprep.subr.mxu0 0.0
        %489 = vmatpush2.msra.mxu0 0.0
        %490 = vmatprep.subr.mxu0 0.0
        %491 = vmatpush2.msra.mxu0 0.0
        %492 = vmatprep.subr.mxu0 0.0
        %493 = vmatpush2.msra.mxu0 0.0
        %494 = vmatprep.subr.mxu0 0.0
        %495 = vmatpush2.msra.mxu0 0.0
        %496 = vmatprep.subr.mxu0 0.0
        %497 = vmatpush2.msra.mxu0 0.0
        %498 = vmatprep.subr.mxu0 0.0
        %499 = vmatpush2.msra.mxu0 0.0
        %500 = vmatprep.subr.mxu0 0.0
        %501 = vmatpush2.msra.mxu0 0.0
        %502 = vmatprep.subr.mxu0 0.0
        %503 = vmatpush2.msra.mxu0 0.0
        %504 = vmatprep.subr.mxu0 0.0
        %505 = vmatpush2.msra.mxu0 0.0
        %506 = vmatprep.subr.mxu0 0.0
        %507 = vmatpush2.msra.mxu0 0.0
        %508 = vmatprep.mubr.f32.mxu0 0.0
        %509 = vmatmul.mubr.f32.gmra.mxu0 %v437
        %v510 = vpop.f32.mrf.mxu0
        %v511 = vadd.f32 %v431, %v510
        %v512 = vpop.f32.mrf.mxu0
        %v513 = vadd.f32 %v431, %v512
        %514 = vdwg.mxu0
        %v515 = vld [vmem:[%s416] sm:$0xf]
        %v517 = vsel %vm439, %v515, 0
        %519 = vmatprep.subr.mxu0 0.0
        %520 = vmatpush1.msra.mxu0 0.0
        %521 = vmatprep.subr.mxu0 0.0
        %522 = vmatpush1.msra.mxu0 0.0
        %523 = vmatprep.subr.mxu0 0.0
        %524 = vmatpush1.msra.mxu0 0.0
        %525 = vmatprep.subr.mxu0 0.0
        %526 = vmatpush1.msra.mxu0 0.0
        %527 = vmatprep.subr.mxu0 0.0
        %528 = vmatpush1.msra.mxu0 0.0
        %529 = vmatprep.subr.mxu0 0.0
        %530 = vmatpush1.msra.mxu0 0.0
        %531 = vmatprep.subr.mxu0 0.0
        %532 = vmatpush1.msra.mxu0 0.0
        %533 = vmatprep.subr.mxu0 0.0
        %534 = vmatpush1.msra.mxu0 0.0
        %535 = vmatprep.subr.mxu0 0.0
        %536 = vmatpush1.msra.mxu0 0.0
        %537 = vmatprep.subr.mxu0 0.0
        %538 = vmatpush1.msra.mxu0 0.0
        %539 = vmatprep.subr.mxu0 0.0
        %540 = vmatpush1.msra.mxu0 0.0
        %541 = vmatprep.subr.mxu0 0.0
        %542 = vmatpush1.msra.mxu0 0.0
        %543 = vmatprep.subr.mxu0 0.0
        %544 = vmatpush1.msra.mxu0 0.0
        %545 = vmatprep.subr.mxu0 0.0
        %546 = vmatpush1.msra.mxu0 0.0
        %547 = vmatprep.subr.mxu0 0.0
        %548 = vmatpush1.msra.mxu0 0.0
        %549 = vmatprep.subr.mxu0 0.0
        %550 = vmatpush1.msra.mxu0 %v517
        %551 = vmatprep.subr.mxu0 0.0
        %552 = vmatpush2.msra.mxu0 0.0
        %553 = vmatprep.subr.mxu0 0.0
        %554 = vmatpush2.msra.mxu0 0.0
        %555 = vmatprep.subr.mxu0 0.0
        %556 = vmatpush2.msra.mxu0 0.0
        %557 = vmatprep.subr.mxu0 0.0
        %558 = vmatpush2.msra.mxu0 0.0
        %559 = vmatprep.subr.mxu0 0.0
        %560 = vmatpush2.msra.mxu0 0.0
        %561 = vmatprep.subr.mxu0 0.0
        %562 = vmatpush2.msra.mxu0 0.0
        %563 = vmatprep.subr.mxu0 0.0
        %564 = vmatpush2.msra.mxu0 0.0
        %565 = vmatprep.subr.mxu0 0.0
        %566 = vmatpush2.msra.mxu0 0.0
        %567 = vmatprep.subr.mxu0 0.0
        %568 = vmatpush2.msra.mxu0 0.0
        %569 = vmatprep.subr.mxu0 0.0
        %570 = vmatpush2.msra.mxu0 0.0
        %571 = vmatprep.subr.mxu0 0.0
        %572 = vmatpush2.msra.mxu0 0.0
        %573 = vmatprep.subr.mxu0 0.0
        %574 = vmatpush2.msra.mxu0 0.0
        %575 = vmatprep.subr.mxu0 0.0
        %576 = vmatpush2.msra.mxu0 0.0
        %577 = vmatprep.subr.mxu0 0.0
        %578 = vmatpush2.msra.mxu0 0.0
        %579 = vmatprep.subr.mxu0 0.0
        %580 = vmatpush2.msra.mxu0 0.0
        %581 = vmatprep.subr.mxu0 0.0
        %582 = vmatpush2.msra.mxu0 0.0
        %583 = vmatprep.mubr.f32.mxu0 0.0
        %584 = vmatmul.mubr.f32.gmra.mxu0 %v437
        %v585 = vpop.f32.mrf.mxu0
        %v586 = vadd.f32 %v431, %v585
        %v587 = vpop.f32.mrf.mxu0
        %588 = vdwg.mxu0
        %v589 = vld [vmem:[%s423] sm:$0xf]
        %v591 = vsel %vm439, %v589, 0
        %593 = vmatprep.subr.mxu0 0.0
        %594 = vmatpush1.msra.mxu0 0.0
        %595 = vmatprep.subr.mxu0 0.0
        %596 = vmatpush1.msra.mxu0 0.0
        %597 = vmatprep.subr.mxu0 0.0
        %598 = vmatpush1.msra.mxu0 0.0
        %599 = vmatprep.subr.mxu0 0.0
        %600 = vmatpush1.msra.mxu0 0.0
        %601 = vmatprep.subr.mxu0 0.0
        %602 = vmatpush1.msra.mxu0 0.0
        %603 = vmatprep.subr.mxu0 0.0
        %604 = vmatpush1.msra.mxu0 0.0
        %605 = vmatprep.subr.mxu0 0.0
        %606 = vmatpush1.msra.mxu0 0.0
        %607 = vmatprep.subr.mxu0 0.0
        %608 = vmatpush1.msra.mxu0 0.0
        %609 = vmatprep.subr.mxu0 0.0
        %610 = vmatpush1.msra.mxu0 0.0
        %611 = vmatprep.subr.mxu0 0.0
        %612 = vmatpush1.msra.mxu0 0.0
        %613 = vmatprep.subr.mxu0 0.0
        %614 = vmatpush1.msra.mxu0 0.0
        %615 = vmatprep.subr.mxu0 0.0
        %616 = vmatpush1.msra.mxu0 0.0
        %617 = vmatprep.subr.mxu0 0.0
        %618 = vmatpush1.msra.mxu0 0.0
        %619 = vmatprep.subr.mxu0 0.0
        %620 = vmatpush1.msra.mxu0 0.0
        %621 = vmatprep.subr.mxu0 0.0
        %622 = vmatpush1.msra.mxu0 0.0
        %623 = vmatprep.subr.mxu0 0.0
        %624 = vmatpush1.msra.mxu0 %v591
        %625 = vmatprep.subr.mxu0 0.0
        %626 = vmatpush2.msra.mxu0 0.0
        %627 = vmatprep.subr.mxu0 0.0
        %628 = vmatpush2.msra.mxu0 0.0
        %629 = vmatprep.subr.mxu0 0.0
        %630 = vmatpush2.msra.mxu0 0.0
        %631 = vmatprep.subr.mxu0 0.0
        %632 = vmatpush2.msra.mxu0 0.0
        %633 = vmatprep.subr.mxu0 0.0
        %634 = vmatpush2.msra.mxu0 0.0
        %635 = vmatprep.subr.mxu0 0.0
        %636 = vmatpush2.msra.mxu0 0.0
        %637 = vmatprep.subr.mxu0 0.0
        %638 = vmatpush2.msra.mxu0 0.0
        %639 = vmatprep.subr.mxu0 0.0
        %640 = vmatpush2.msra.mxu0 0.0
        %641 = vmatprep.subr.mxu0 0.0
        %642 = vmatpush2.msra.mxu0 0.0
        %643 = vmatprep.subr.mxu0 0.0
        %644 = vmatpush2.msra.mxu0 0.0
        %645 = vmatprep.subr.mxu0 0.0
        %646 = vmatpush2.msra.mxu0 0.0
        %647 = vmatprep.subr.mxu0 0.0
        %648 = vmatpush2.msra.mxu0 0.0
        %649 = vmatprep.subr.mxu0 0.0
        %650 = vmatpush2.msra.mxu0 0.0
        %651 = vmatprep.subr.mxu0 0.0
        %652 = vmatpush2.msra.mxu0 0.0
        %653 = vmatprep.subr.mxu0 0.0
        %654 = vmatpush2.msra.mxu0 0.0
        %655 = vmatprep.subr.mxu0 0.0
        %656 = vmatpush2.msra.mxu0 0.0
        %657 = vmatprep.mubr.f32.mxu0 0.0
        %658 = vmatmul.mubr.f32.gmra.mxu0 %v437
        %v659 = vpop.f32.mrf.mxu0
        %v660 = vadd.f32 %v431, %v659
        %v661 = vpop.f32.mrf.mxu0
        %662 = vdwg.mxu0
        %vm663 = vcmask 130048
        %664 = vst.msk [vmem:[#allocation2] sm:$0xff] %vm663, %v431
        %666 = vrot.lane.b32.xlu0 %v586, 16
        %v667 = vpop.permute.xlu0 %666
        %vm669 = vcmask 261248
        %670 = vst.msk [vmem:[#allocation2] sm:$0xff] %vm669, %v667
        %673 = vrot.lane.b32.xlu0 %v511, 32
        %v674 = vpop.permute.xlu0 %673
        %675 = vrot.lane.b32.xlu0 %v513, 32
        %v676 = vpop.permute.xlu0 %675
        %vm677 = vcmask 261120
        %v678 = vsel %vm677, %v674, %v676
        %vm682 = vcmask 1047808
        %683 = vst.msk [vmem:[#allocation2] sm:$0xff] %vm682, %v674
        %684 = vst [vmem:[#allocation2 + $0x8] sm:$0xff] %v678
        %685 = vst.msk [vmem:[#allocation2 + $0x10] sm:$0xff] %vm677, %v676
        %687 = vrot.lane.b32.xlu0 %v660, 32
        %v688 = vpop.permute.xlu0 %687
        %vm690 = vcmask 392448
        %691 = vst.msk [vmem:[#allocation2 + $0x10] sm:$0xff] %vm690, %v688
        %vm692 = vcmask 523648
        %693 = vst.msk [vmem:[#allocation2 + $0x10] sm:$0xff] %vm692, %v431
        %v694 = vlaneseq
        %v695 = vand.u32 %v694, 127
        %v696 = vadd.s32 %v695, 128
        %vm697 = vcmp.lt.s32.totalorder %v695, 0
        %v698 = vsub.s32 0, %v695
        %v699 = vsel %vm697, %v698, %v695
        %v700 = vshrl.u32 %v699, 4
        %v701 = vand.u32 %v699, 15
        %v702 = vsub.s32 0, %v701
        %v703 = vsel %vm697, %v702, %v701
        %vm704 = vcmp.lt.s32.totalorder %v696, 0
        %v705 = vsub.s32 0, %v696
        %v706 = vsel %vm704, %v705, %v696
        %v707 = vshrl.u32 %v706, 4
        %v708 = vand.u32 %v706, 15
        %v709 = vsub.s32 0, %v708
        %v710 = vsel %vm704, %v709, %v708
        %vm711 = vcmp.ne.s32.totalorder %v703, 0
        %vm712 = vcmp.ne.s32.totalorder %v710, 0
        %vm713 = vcmp.lt.s32.totalorder %v703, 0
        %vm714 = vcmp.lt.s32.totalorder %v710, 0
        %vm715 = vmand %vm713, %vm711
        %vm716 = vmand %vm714, %vm712
        %v717 = vadd.s32 %v703, 16
        %v718 = vadd.s32 %v710, 16
        %v719 = vsel %vm715, %v717, %v703
        %v720 = vsel %vm716, %v718, %v710
        %vm721 = vcmp.gt.s32.totalorder %v719, 0
        %vm722 = vcmp.gt.s32.totalorder %v720, 0
        %vm723 = vcmp.lt.s32.totalorder %v719, 15
        %vm724 = vcmp.lt.s32.totalorder %v720, 15
        %v725 = vld [vmem:[#allocation2] sm:$0xff]
        %v726 = vld [vmem:[#allocation2 + $0x8] sm:$0xff]
        %v727 = vld [vmem:[#allocation2 + $0x10] sm:$0xff]
        %v728 = vsel %vm721, 1, 0
        %v729 = vsel %vm722, 1, 0
        %vm730 = vcmp.eq.s32.totalorder %v728, 1
        %vm731 = vcmp.eq.s32.totalorder %v729, 1
        %735 = vrot.lane.b32.xlu0 %v725, 113
        %v736 = vpop.permute.xlu0 %735
        %737 = vrot.lane.b32.xlu0 %v726, 113
        %v738 = vpop.permute.xlu0 %737
        %739 = vrot.lane.b32.xlu0 %v727, 113
        %v740 = vpop.permute.xlu0 %739
        %vm741 = vcmask 924672
        %v742 = vsel %vm741, %v736, %v738
        %v743 = vsel %vm741, %v738, %v740
        %v746 = vsel %vm730, %v742, %v431
        %v747 = vsel %vm731, %v743, %v431
        %v748 = vsel %vm723, 1, 0
        %v749 = vsel %vm724, 1, 0
        %vm750 = vcmp.eq.s32.totalorder %v748, 1
        %vm751 = vcmp.eq.s32.totalorder %v749, 1
        %752 = vrot.lane.b32.xlu0 %v725, 111
        %v753 = vpop.permute.xlu0 %752
        %754 = vrot.lane.b32.xlu0 %v726, 111
        %v755 = vpop.permute.xlu0 %754
        %756 = vrot.lane.b32.xlu0 %v727, 111
        %v757 = vpop.permute.xlu0 %756
        %vm758 = vcmask 908288
        %v759 = vsel %vm758, %v753, %v755
        %v760 = vsel %vm758, %v755, %v757
        %v763 = vsel %vm750, %v759, %v431
        %v764 = vsel %vm751, %v760, %v431
        %765 = vrot.lane.b32.xlu0 %v725, 97
        %v766 = vpop.permute.xlu0 %765
        %767 = vrot.lane.b32.xlu0 %v726, 97
        %v768 = vpop.permute.xlu0 %767
        %769 = vrot.lane.b32.xlu0 %v727, 97
        %v770 = vpop.permute.xlu0 %769
        %vm771 = vcmask 793600
        %v772 = vsel %vm771, %v766, %v768
        %v773 = vsel %vm771, %v768, %v770
        %v776 = vsel %vm730, %v772, %v431
        %v777 = vsel %vm731, %v773, %v431
        %778 = vrot.lane.b32.xlu0 %v725, 95
        %v779 = vpop.permute.xlu0 %778
        %780 = vrot.lane.b32.xlu0 %v726, 95
        %v781 = vpop.permute.xlu0 %780
        %782 = vrot.lane.b32.xlu0 %v727, 95
        %v783 = vpop.permute.xlu0 %782
        %vm784 = vcmask 777216
        %v785 = vsel %vm784, %v779, %v781
        %v786 = vsel %vm784, %v781, %v783
        %v789 = vsel %vm750, %v785, %v431
        %v790 = vsel %vm751, %v786, %v431
        %791 = vrot.lane.b32.xlu0 %v725, 81
        %v792 = vpop.permute.xlu0 %791
        %793 = vrot.lane.b32.xlu0 %v726, 81
        %v794 = vpop.permute.xlu0 %793
        %795 = vrot.lane.b32.xlu0 %v727, 81
        %v796 = vpop.permute.xlu0 %795
        %vm797 = vcmask 662528
        %v798 = vsel %vm797, %v792, %v794
        %v799 = vsel %vm797, %v794, %v796
        %v802 = vsel %vm730, %v798, %v431
        %v803 = vsel %vm731, %v799, %v431
        %804 = vrot.lane.b32.xlu0 %v725, 79
        %v805 = vpop.permute.xlu0 %804
        %806 = vrot.lane.b32.xlu0 %v726, 79
        %v807 = vpop.permute.xlu0 %806
        %808 = vrot.lane.b32.xlu0 %v727, 79
        %v809 = vpop.permute.xlu0 %808
        %vm810 = vcmask 646144
        %v811 = vsel %vm810, %v805, %v807
        %v812 = vsel %vm810, %v807, %v809
        %v815 = vsel %vm750, %v811, %v431
        %v816 = vsel %vm751, %v812, %v431
        %817 = vrot.lane.b32.xlu0 %v725, 112
        %v818 = vpop.permute.xlu0 %817
        %819 = vrot.lane.b32.xlu0 %v726, 112
        %v820 = vpop.permute.xlu0 %819
        %821 = vrot.lane.b32.xlu0 %v727, 112
        %v822 = vpop.permute.xlu0 %821
        %vm823 = vcmask 916480
        %v824 = vsel %vm823, %v818, %v820
        %v825 = vsel %vm823, %v820, %v822
        %828 = vrot.lane.b32.xlu0 %v725, 96
        %v829 = vpop.permute.xlu0 %828
        %830 = vrot.lane.b32.xlu0 %v726, 96
        %v831 = vpop.permute.xlu0 %830
        %832 = vrot.lane.b32.xlu0 %v727, 96
        %v833 = vpop.permute.xlu0 %832
        %vm834 = vcmask 785408
        %v835 = vsel %vm834, %v829, %v831
        %v836 = vsel %vm834, %v831, %v833
        %839 = vrot.lane.b32.xlu0 %v725, 80
        %v840 = vpop.permute.xlu0 %839
        %841 = vrot.lane.b32.xlu0 %v726, 80
        %v842 = vpop.permute.xlu0 %841
        %843 = vrot.lane.b32.xlu0 %v727, 80
        %v844 = vpop.permute.xlu0 %843
        %vm845 = vcmask 654336
        %v846 = vsel %vm845, %v840, %v842
        %v847 = vsel %vm845, %v842, %v844
        %v850 = vld [vmem:[%s5] sm:$0xff]
        %v851 = vld [vmem:[%s6] sm:$0xff]
        %853 = vset.pattern.permute.xlu0 0
        %854 = vperm.xlu0 %853, %v851
        %v855 = vpop.permute.xlu0 %854
        %vm857 = vcmask 588800
        %v859 = vsel %vm857, %v850, 0
        %861 = vmatprep.subr.mxu0 0.0
        %862 = vmatpush1.msra.mxu0 0.0
        %863 = vmatprep.subr.mxu0 0.0
        %864 = vmatpush1.msra.mxu0 0.0
        %865 = vmatprep.subr.mxu0 0.0
        %866 = vmatpush1.msra.mxu0 0.0
        %867 = vmatprep.subr.mxu0 0.0
        %868 = vmatpush1.msra.mxu0 0.0
        %869 = vmatprep.subr.mxu0 0.0
        %870 = vmatpush1.msra.mxu0 0.0
        %871 = vmatprep.subr.mxu0 0.0
        %872 = vmatpush1.msra.mxu0 0.0
        %873 = vmatprep.subr.mxu0 0.0
        %874 = vmatpush1.msra.mxu0 0.0
        %875 = vmatprep.subr.mxu0 %v816
        %876 = vmatpush1.msra.mxu0 %v815
        %877 = vmatprep.subr.mxu0 %v847
        %878 = vmatpush1.msra.mxu0 %v846
        %879 = vmatprep.subr.mxu0 %v803
        %880 = vmatpush1.msra.mxu0 %v802
        %881 = vmatprep.subr.mxu0 %v790
        %882 = vmatpush1.msra.mxu0 %v789
        %883 = vmatprep.subr.mxu0 %v836
        %884 = vmatpush1.msra.mxu0 %v835
        %885 = vmatprep.subr.mxu0 %v777
        %886 = vmatpush1.msra.mxu0 %v776
        %887 = vmatprep.subr.mxu0 %v764
        %888 = vmatpush1.msra.mxu0 %v763
        %889 = vmatprep.subr.mxu0 %v825
        %890 = vmatpush1.msra.mxu0 %v824
        %891 = vmatprep.subr.mxu0 %v747
        %892 = vmatpush1.msra.mxu0 %v746
        %893 = vmatprep.subr.mxu0 0.0
        %894 = vmatpush2.msra.mxu0 0.0
        %895 = vmatprep.subr.mxu0 0.0
        %896 = vmatpush2.msra.mxu0 0.0
        %897 = vmatprep.subr.mxu0 0.0
        %898 = vmatpush2.msra.mxu0 0.0
        %899 = vmatprep.subr.mxu0 0.0
        %900 = vmatpush2.msra.mxu0 0.0
        %901 = vmatprep.subr.mxu0 0.0
        %902 = vmatpush2.msra.mxu0 0.0
        %903 = vmatprep.subr.mxu0 0.0
        %904 = vmatpush2.msra.mxu0 0.0
        %905 = vmatprep.subr.mxu0 0.0
        %906 = vmatpush2.msra.mxu0 0.0
        %907 = vmatprep.subr.mxu0 0.0
        %908 = vmatpush2.msra.mxu0 0.0
        %909 = vmatprep.subr.mxu0 0.0
        %910 = vmatpush2.msra.mxu0 0.0
        %911 = vmatprep.subr.mxu0 0.0
        %912 = vmatpush2.msra.mxu0 0.0
        %913 = vmatprep.subr.mxu0 0.0
        %914 = vmatpush2.msra.mxu0 0.0
        %915 = vmatprep.subr.mxu0 0.0
        %916 = vmatpush2.msra.mxu0 0.0
        %917 = vmatprep.subr.mxu0 0.0
        %918 = vmatpush2.msra.mxu0 0.0
        %919 = vmatprep.subr.mxu0 0.0
        %920 = vmatpush2.msra.mxu0 0.0
        %921 = vmatprep.subr.mxu0 0.0
        %922 = vmatpush2.msra.mxu0 0.0
        %923 = vmatprep.subr.mxu0 0.0
        %924 = vmatpush2.msra.mxu0 0.0
        %925 = vmatprep.mubr.f32.mxu0 0.0
        %926 = vmatmul.mubr.f32.gmra.mxu0 %v859
        %v927 = vpop.f32.mrf.mxu0
        %v928 = vadd.f32 %v855, %v927
        %v929 = vpop.f32.mrf.mxu0
        %v930 = vadd.f32 %v855, %v929
        %931 = vdwg.mxu0
        %v932 = vld [vmem:[%s7] sm:$0xf]
        %v933 = vld [vmem:[%s8] sm:$0xf]
        %935 = vset.pattern.permute.xlu0 0
        %936 = vperm.xlu0 %935, %v933
        %v937 = vpop.permute.xlu0 %936
        %vm939 = vcmask 64512
        %v941 = vsel %vm939, %v932, 0
        %943 = vmatprep.subr.mxu0 0.0
        %944 = vmatpush1.msra.mxu0 0.0
        %945 = vmatprep.subr.mxu0 0.0
        %946 = vmatpush1.msra.mxu0 0.0
        %947 = vmatprep.subr.mxu0 0.0
        %948 = vmatpush1.msra.mxu0 0.0
        %949 = vmatprep.subr.mxu0 0.0
        %950 = vmatpush1.msra.mxu0 0.0
        %951 = vmatprep.subr.mxu0 0.0
        %952 = vmatpush1.msra.mxu0 0.0
        %953 = vmatprep.subr.mxu0 0.0
        %954 = vmatpush1.msra.mxu0 0.0
        %955 = vmatprep.subr.mxu0 0.0
        %956 = vmatpush1.msra.mxu0 0.0
        %957 = vmatprep.subr.mxu0 0.0
        %958 = vmatpush1.msra.mxu0 0.0
        %959 = vmatprep.subr.mxu0 0.0
        %960 = vmatpush1.msra.mxu0 0.0
        %961 = vmatprep.subr.mxu0 0.0
        %962 = vmatpush1.msra.mxu0 0.0
        %963 = vmatprep.subr.mxu0 0.0
        %964 = vmatpush1.msra.mxu0 0.0
        %965 = vmatprep.subr.mxu0 0.0
        %966 = vmatpush1.msra.mxu0 0.0
        %967 = vmatprep.subr.mxu0 0.0
        %968 = vmatpush1.msra.mxu0 0.0
        %969 = vmatprep.subr.mxu0 0.0
        %970 = vmatpush1.msra.mxu0 0.0
        %971 = vmatprep.subr.mxu0 0.0
        %972 = vmatpush1.msra.mxu0 0.0
        %973 = vmatprep.subr.mxu0 %v930
        %974 = vmatpush1.msra.mxu0 %v928
        %975 = vmatprep.subr.mxu0 0.0
        %976 = vmatpush2.msra.mxu0 0.0
        %977 = vmatprep.subr.mxu0 0.0
        %978 = vmatpush2.msra.mxu0 0.0
        %979 = vmatprep.subr.mxu0 0.0
        %980 = vmatpush2.msra.mxu0 0.0
        %981 = vmatprep.subr.mxu0 0.0
        %982 = vmatpush2.msra.mxu0 0.0
        %983 = vmatprep.subr.mxu0 0.0
        %984 = vmatpush2.msra.mxu0 0.0
        %985 = vmatprep.subr.mxu0 0.0
        %986 = vmatpush2.msra.mxu0 0.0
        %987 = vmatprep.subr.mxu0 0.0
        %988 = vmatpush2.msra.mxu0 0.0
        %989 = vmatprep.subr.mxu0 0.0
        %990 = vmatpush2.msra.mxu0 0.0
        %991 = vmatprep.subr.mxu0 0.0
        %992 = vmatpush2.msra.mxu0 0.0
        %993 = vmatprep.subr.mxu0 0.0
        %994 = vmatpush2.msra.mxu0 0.0
        %995 = vmatprep.subr.mxu0 0.0
        %996 = vmatpush2.msra.mxu0 0.0
        %997 = vmatprep.subr.mxu0 0.0
        %998 = vmatpush2.msra.mxu0 0.0
        %999 = vmatprep.subr.mxu0 0.0
        %1000 = vmatpush2.msra.mxu0 0.0
        %1001 = vmatprep.subr.mxu0 0.0
        %1002 = vmatpush2.msra.mxu0 0.0
        %1003 = vmatprep.subr.mxu0 0.0
        %1004 = vmatpush2.msra.mxu0 0.0
        %1005 = vmatprep.subr.mxu0 0.0
        %1006 = vmatpush2.msra.mxu0 0.0
        %1007 = vmatprep.mubr.f32.mxu0 0.0
        %1008 = vmatmul.mubr.f32.gmra.mxu0 %v941
        %v1009 = vpop.f32.mrf.mxu0
        %v1010 = vadd.f32 %v937, %v1009
        %v1011 = vpop.f32.mrf.mxu0
        %v1012 = vadd.f32 %v937, %v1011
        %1013 = vdwg.mxu0
        %v1015 = vadd.f32 %v1010, %v425
        %v1016 = vadd.f32 %v1012, %v434
        %v1019 = vcombine.low %v1015, %v1016
        %1021 = vst [vmem:[%s408] sm:$0xff] %v1019
        %s1022 = sand.u32 %s258, 1
        %s1023 = scalar_lea.sflag [#allocation5], %s1022
        %s1024 = sand.u32 %s258, 1
        %s1025 = smul.addr %s1024, 8
        %s1026 = scalar_lea.vmem [#allocation6], %s1025
        // Predicated region
        $region61: #{tpu_custom_call.1} parent=55 // pred_check
          %p1027 = pneg %p268
        $region62: #{tpu_custom_call.1} parent=55 // pred_check_branch
          %1029 = sbr.rel (%p1027) target = $region64
        $region63: #{tpu_custom_call.1} parent=55 // pred_region
          %s1030 = smul.u32 2, %s31
          %s1032 = ssub.s32 128, 128
          %1033 = vsyncadd %s1023, %s1032
          %s1034 = smul.addr %s30, 2
          %s1035 = sadd.s32 %s1030, %s1034
          %s1036 = smul.addr %s1035, 64
          %s1037 = scalar_lea.hbm %s9, %s1036
          %s1039 = sshll.u32 %s1026, 4
          %s1040 = int_to_ptr.vmem [resolvable:$true] %s1039
          %1042 = dma.vmem_to_hbm [thread:$0]  %s1040, 128, %s1037, %s1023
        $region64: #{tpu_custom_call.1} parent=55 // pred_fallthru
          _
      $region56: #{tpu_custom_call.1} parent=5 // pred_fallthru
        _
      %p1043 = scmp.le.s32.totalorder 2, %s21
      // Predicated region
      $region65: #{tpu_custom_call.1} parent=5 // pred_check
        %p1044 = pneg %p1043
      $region66: #{tpu_custom_call.1} parent=5 // pred_check_branch
        %1046 = sbr.rel (%p1044) target = $region68
      $region67: #{tpu_custom_call.1} parent=5 // pred_region
        %s1047 = ssub.s32 %s21, 2
        // Predicated region
        $region69: #{tpu_custom_call.1} parent=67 // pred_check
          %p1048 = pneg %p274
        $region70: #{tpu_custom_call.1} parent=67 // pred_check_branch
          %1050 = sbr.rel (%p1048) target = $region72
        $region71: #{tpu_custom_call.1} parent=67 // pred_region
          %s1051 = sand.u32 %s259, 1
          %s1052 = scalar_lea.sflag [#allocation5], %s1051
          %s1053 = sand.u32 %s259, 1
          %s1054 = smul.addr %s1053, 8
          %s1055 = scalar_lea.vmem [#allocation6], %s1054
          %1056 = dma.done %s1052, 128
        $region72: #{tpu_custom_call.1} parent=67 // pred_fallthru
          _
      $region68: #{tpu_custom_call.1} parent=5 // pred_fallthru
        _
    $region6: #{tpu_custom_call.1} parent=1 // loop_footer
      %s25 = sadd.s32 1, %s21
    $region7: #{tpu_custom_call.1} parent=1 // loop_footer_branch
      %20 = sbr.rel target = $region3
    $region8: #{tpu_custom_call.1} parent=1 // loop_exit
      _
    %1057 = vsyncpa [#allocation4], 1
    %s1058 = scalar_lea.sflag [#allocation4], 1
    %1059 = vsyncpa %s1058, 1
    %1060 = vsyncpa [#allocation5], 1
    %s1061 = scalar_lea.sflag [#allocation5], 1
    %1062 = vsyncpa %s1061, 1

</llo_original>
